<compile_context>
chip_gen: v7x
topology: tpu7x:2x2x1
jax: 0.10.0
libtpu: 0.0.40
codegen_flags: <defaults>
</compile_context>

<pallas_src>
import functools

import jax
import jax.numpy as jnp
from jax.experimental import pallas as pl
from jax.experimental.pallas import tpu as pltpu


def _mlp_kernel(x_ref, w1_ref, b1_ref, w2_ref, b2_ref, o_ref):
    # linear1 on the MXU: [TILE_B, D_in] @ [D_in, H], f32 accumulation.
    h = jnp.dot(x_ref[...], w1_ref[...], preferred_element_type=jnp.float32)
    h = jnp.maximum(h + b1_ref[...], 0.0)                    # bias + ReLU (f32, VPU)
    # linear2 (out_features == 1): elementwise multiply + lane reduction on
    # VPU/XLU instead of a 1-column MXU matmul.
    z = jnp.sum(h * w2_ref[...], axis=-1) + b2_ref[0, 0]     # [TILE_B]
    # sigmoid: exp + approx reciprocal both land on the (otherwise idle) EUP slot.
    p = pl.reciprocal(1.0 + jnp.exp(-z), approx=True)
    # lane-dense store: batch on the 128-lane axis of the [1, TILE_B] block.
    o_ref[...] = p[None, :].astype(o_ref.dtype)


def _round_up(n, m):
    return ((n + m - 1) // m) * m


@functools.partial(jax.jit, static_argnames=("tile_b", "matmul_dtype"))
def neural_net1_forward(x, w1, b1, w2, b2, *, tile_b=512, matmul_dtype=jnp.float32):
    """Forward pass of NeuralNet1.

    x:  [B, D_in] float32
    w1: [D_in, H]  (PyTorch linear1.weight transposed)
    b1: [H]
    w2: [1, H]     (PyTorch linear2.weight, as-is)
    b2: [1]
    returns: [B, 1] float32 sigmoid probabilities.
    """
    B, D_in = x.shape
    H = w1.shape[1]

    # Keep the batch tile a multiple of 128 (lane-dense output slab) but do not
    # over-pad tiny batches. TILE_B=512 with D_in=32 is ~128 KiB double-buffered
    # x traffic -> comfortably inside v7x's 64 MiB VMEM.
    tile_b = max(128, min(int(tile_b), _round_up(B, 128)))
    b_pad = _round_up(B, tile_b)
    if b_pad != B:
        # Zero-padded rows just compute sigmoid of garbage and are sliced away.
        x = jnp.pad(x, ((0, b_pad - B), (0, 0)))
    grid = (b_pad // tile_b,)

    # Optional bf16 matmul inputs (v6e/v7x); epilogue and accumulation stay f32.
    x_in = x.astype(matmul_dtype)
    w1_in = w1.astype(matmul_dtype)
    b1_2d = b1.reshape(1, H).astype(jnp.float32)
    w2_row = w2.reshape(1, H).astype(jnp.float32)
    b2_2d = b2.reshape(1, 1).astype(jnp.float32)

    cost = pl.CostEstimate(
        flops=int(2 * b_pad * D_in * H + 3 * b_pad * H + 6 * b_pad),
        transcendentals=int(b_pad),
        bytes_accessed=int(
            x_in.size * x_in.dtype.itemsize
            + w1_in.size * w1_in.dtype.itemsize
            + (b1_2d.size + w2_row.size + b2_2d.size + b_pad) * 4
        ),
    )

    out_row = pl.pallas_call(
        _mlp_kernel,
        out_shape=jax.ShapeDtypeStruct((1, b_pad), jnp.float32),
        grid=grid,
        in_specs=[
            pl.BlockSpec((tile_b, D_in), lambda i: (i, 0)),    # x: tiled over batch
            pl.BlockSpec((D_in, H), lambda i: (0, 0)),         # w1: VMEM-resident
            pl.BlockSpec((1, H), lambda i: (0, 0)),            # b1: VMEM-resident
            pl.BlockSpec((1, H), lambda i: (0, 0)),            # w2 row: VMEM-resident
            pl.BlockSpec(memory_space=pltpu.MemorySpace.SMEM),  # b2: SMEM scalar
        ],
        out_specs=pl.BlockSpec((1, tile_b), lambda i: (0, i)),  # lane-dense slab
        compiler_params=pltpu.CompilerParams(
            dimension_semantics=("parallel",),  # v7x: shard batch tiles across TCs
        ),
        cost_estimate=cost,
    )(x_in, w1_in, b1_2d, w2_row, b2_2d)

    return out_row[0, :B].reshape(B, 1)


def init_params(key, input_size, hidden_size):
    """Deterministic init matching PyTorch nn.Linear default (uniform +-1/sqrt(fan_in))."""
    k1, k2, k3, k4 = jax.random.split(key, 4)
    bound1 = 1.0 / jnp.sqrt(jnp.float32(input_size))
    bound2 = 1.0 / jnp.sqrt(jnp.float32(hidden_size))
    # w1 stored pre-transposed relative to PyTorch's (out, in) layout; w2 kept
    # in PyTorch layout (1, hidden) since the kernel wants it as a row.
    w1 = jax.random.uniform(k1, (input_size, hidden_size), jnp.float32, -bound1, bound1)
    b1 = jax.random.uniform(k2, (hidden_size,), jnp.float32, -bound1, bound1)
    w2 = jax.random.uniform(k3, (1, hidden_size), jnp.float32, -bound2, bound2)
    b2 = jax.random.uniform(k4, (1,), jnp.float32, -bound2, bound2)
    return w1, b1, w2, b2


if __name__ == "__main__":
    input_size = 32
    hidden_size = 32
    batch = 8

    key = jax.random.PRNGKey(0)
    kx, kp = jax.random.split(key)
    x = jax.random.normal(kx, (batch, input_size), jnp.float32)
    w1, b1, w2, b2 = init_params(kp, input_size, hidden_size)

    # Pure-JAX reference (matches the PyTorch module in f32).
    ref = jax.nn.sigmoid(jnp.maximum(x @ w1 + b1, 0.0) @ w2.T + b2)

    # f32 path (exact module semantics; only the approx reciprocal differs).
    out = jax.block_until_ready(neural_net1_forward(x, w1, b1, w2, b2))
    assert out.shape == (batch, 1)
    assert jnp.allclose(out, ref, atol=2e-3, rtol=2e-3), float(jnp.max(jnp.abs(out - ref)))

    # bf16-MXU path (recommended on v6e/v7x); looser tolerance for bf16 inputs.
    out_bf16 = jax.block_until_ready(
        neural_net1_forward(x, w1, b1, w2, b2, matmul_dtype=jnp.bfloat16))
    assert jnp.allclose(out_bf16, ref, atol=5e-2, rtol=5e-2)

    print("KERNEL_OK")
</pallas_src>

<mosaic_0001>
module attributes {stable_mosaic.version = 11 : i64} {
  func.func @_mlp_kernel(%arg0: i32, %arg1: memref<128x32xf32, #tpu.memory_space<vmem>>, %arg2: memref<32x32xf32, #tpu.memory_space<vmem>>, %arg3: memref<1x32xf32, #tpu.memory_space<vmem>>, %arg4: memref<1x32xf32, #tpu.memory_space<vmem>>, %arg5: memref<1x1xf32, #tpu.memory_space<smem>>, %arg6: memref<1x128xf32, #tpu.memory_space<vmem>>) attributes {dimension_semantics = [#tpu.dimension_semantics<parallel>], iteration_bounds = array<i64: 1>, scalar_prefetch = 0 : i64, scratch_operands = 0 : i64, tpu.core_type = #tpu.core_type<tc>, window_params = [{transform_indices = @transform_0, window_bounds = array<i64: 128, 32>}, {pipeline_mode = #tpu.pipeline_mode<synchronous>, transform_indices = @transform_1, window_bounds = array<i64: 32, 32>}, {pipeline_mode = #tpu.pipeline_mode<synchronous>, transform_indices = @transform_2, window_bounds = array<i64: 1, 32>}, {pipeline_mode = #tpu.pipeline_mode<synchronous>, transform_indices = @transform_3, window_bounds = array<i64: 1, 32>}, {transform_indices = @transform_4, window_bounds = array<i64: 1, 1>}, {transform_indices = @transform_5, window_bounds = array<i64: 1, 128>}]} {
    %c0 = arith.constant 0 : index
    %c0_0 = arith.constant 0 : index
    %0 = vector.load %arg1[%c0, %c0_0] : memref<128x32xf32, #tpu.memory_space<vmem>>, vector<128x32xf32>
    %c0_1 = arith.constant 0 : index
    %c0_2 = arith.constant 0 : index
    %1 = vector.load %arg2[%c0_1, %c0_2] : memref<32x32xf32, #tpu.memory_space<vmem>>, vector<32x32xf32>
    %cst = arith.constant dense<0.000000e+00> : vector<128x32xf32>
    %2 = tpu.matmul %0, %1, %cst {dimension_numbers = #tpu.dot_dimension_numbers<[1], [0], [0], [1], [0, 0, 1, 1], [], []>} : vector<128x32xf32>, vector<32x32xf32>, vector<128x32xf32> -> vector<128x32xf32>
    %c0_3 = arith.constant 0 : index
    %c0_4 = arith.constant 0 : index
    %3 = vector.load %arg3[%c0_3, %c0_4] : memref<1x32xf32, #tpu.memory_space<vmem>>, vector<1x32xf32>
    %4 = vector.broadcast %3 : vector<1x32xf32> to vector<128x32xf32>
    %5 = arith.addf %2, %4 : vector<128x32xf32>
    %cst_5 = arith.constant 0.000000e+00 : f32
    %6 = vector.broadcast %cst_5 : f32 to vector<128x32xf32>
    %7 = arith.maximumf %5, %6 : vector<128x32xf32>
    %c0_6 = arith.constant 0 : index
    %c0_7 = arith.constant 0 : index
    %8 = vector.load %arg4[%c0_6, %c0_7] : memref<1x32xf32, #tpu.memory_space<vmem>>, vector<1x32xf32>
    %9 = vector.broadcast %8 : vector<1x32xf32> to vector<128x32xf32>
    %10 = arith.mulf %7, %9 : vector<128x32xf32>
    %cst_8 = arith.constant dense<0.000000e+00> : vector<128xf32>
    %11 = vector.multi_reduction <add>, %10, %cst_8 [1] : vector<128x32xf32> to vector<128xf32>
    %c0_9 = arith.constant 0 : index
    %c0_10 = arith.constant 0 : index
    %12 = memref.load %arg5[%c0_9, %c0_10] : memref<1x1xf32, #tpu.memory_space<smem>>
    %13 = vector.broadcast %12 : f32 to vector<128xf32>
    %14 = arith.addf %11, %13 : vector<128xf32>
    %cst_11 = arith.constant 0.000000e+00 : f32
    %15 = vector.broadcast %cst_11 : f32 to vector<128xf32>
    %16 = arith.subf %15, %14 : vector<128xf32>
    %17 = math.exp %16 : vector<128xf32>
    %cst_12 = arith.constant 1.000000e+00 : f32
    %18 = vector.broadcast %cst_12 : f32 to vector<128xf32>
    %19 = arith.addf %18, %17 : vector<128xf32>
    %20 = tpu.reciprocal %19 {approx = true} : vector<128xf32> -> vector<128xf32>
    %21 = vector.shape_cast %20 : vector<128xf32> to vector<1x128xf32>
    %c0_13 = arith.constant 0 : index
    %c0_14 = arith.constant 0 : index
    %22 = vector.load %arg6[%c0_13, %c0_14] : memref<1x128xf32, #tpu.memory_space<vmem>>, vector<1x128xf32>
    tpu.vector_store %arg6[%c0_13, %c0_14], %21 {strides = array<i32>} : memref<1x128xf32, #tpu.memory_space<vmem>>, vector<1x128xf32>,
    return
  }
  func.func @transform_0(%arg0: i32) -> (i32, i32) {
    %c0_i32 = arith.constant 0 : i32
    %c0_i32_0 = arith.constant 0 : i32
    return %arg0, %c0_i32 : i32, i32
  }
  func.func @transform_1(%arg0: i32) -> (i32, i32) {
    %c0_i32 = arith.constant 0 : i32
    %c0_i32_0 = arith.constant 0 : i32
    %c0_i32_1 = arith.constant 0 : i32
    return %c0_i32, %c0_i32_0 : i32, i32
  }
  func.func @transform_2(%arg0: i32) -> (i32, i32) {
    %c0_i32 = arith.constant 0 : i32
    %c0_i32_0 = arith.constant 0 : i32
    %c0_i32_1 = arith.constant 0 : i32
    return %c0_i32, %c0_i32_0 : i32, i32
  }
  func.func @transform_3(%arg0: i32) -> (i32, i32) {
    %c0_i32 = arith.constant 0 : i32
    %c0_i32_0 = arith.constant 0 : i32
    %c0_i32_1 = arith.constant 0 : i32
    return %c0_i32, %c0_i32_0 : i32, i32
  }
  func.func @transform_4(%arg0: i32) -> (i32, i32) {
    %c0_i32 = arith.constant 0 : i32
    %c0_i32_0 = arith.constant 0 : i32
    %c0_i32_1 = arith.constant 0 : i32
    return %c0_i32, %c0_i32_0 : i32, i32
  }
  func.func @transform_5(%arg0: i32) -> (i32, i32) {
    %c0_i32 = arith.constant 0 : i32
    %c0_i32_0 = arith.constant 0 : i32
    return %c0_i32, %arg0 : i32, i32
  }
}

</mosaic_0001>

<llo_original>
// kernel: neural_net1_forward.1
$region0: #{neural_net1_forward.1}
  #allocation0 [shape = 'u32[]', space=smem, size = 0x4, offset = 0x4, fixed_abs, tag = 'smem constant byte address 0x4 - core index']
  #allocation1 [shape = 'u32[144,128]{1,0:T(1,128)}', space=vmem, size = 0x12000, scoped, tag = 'internal scratch']
  #allocation2 [shape = 'f32[1,1]{1,0:T(1,128)S(6)}', space=smem, size = 0x200, scoped, tag = 'scoped memory for neural_net1_forward.1']
  %s0 = inlined_call_operand.vmem [shape: f32[128,32], index: 0, kind: input, shape index: {}]
  %s1 = inlined_call_operand.vmem [shape: f32[32,32], index: 1, kind: input, shape index: {}]
  %s2 = inlined_call_operand.vmem [shape: f32[1,32], index: 2, kind: input, shape index: {}]
  %s3 = inlined_call_operand.vmem [shape: f32[1,32], index: 3, kind: input, shape index: {}]
  %s4 = inlined_call_operand.<no memory space> [shape: f32[1,1], index: 4, kind: input, shape index: {}]
  %s5 = inlined_call_operand.vmem [shape: f32[1,128], index: 5, kind: output, shape index: {}]
  %s6 = sld [smem:[#allocation0]]
  $region30: #{neural_net1_forward.1} parent=0
    _
  %s8 = ssub.s32 1, %s6
  %s9 = scalar_select 0, %s8, %s6
  %10 = sst [smem:[#allocation2]] %s4
  // Predicated region
  $region2: #{neural_net1_forward.1} parent=0 // pred_check
    _
  $region3: #{neural_net1_forward.1} parent=0 // pred_check_branch
    %12 = sbr.rel (0) target = $region5
  $region4: #{neural_net1_forward.1} parent=0 // pred_region
    _
  $region5: #{neural_net1_forward.1} parent=0 // pred_fallthru
    _
  // Predicated region
  $region6: #{neural_net1_forward.1} parent=0 // pred_check
    _
  $region7: #{neural_net1_forward.1} parent=0 // pred_check_branch
    %14 = sbr.rel (0) target = $region9
  $region8: #{neural_net1_forward.1} parent=0 // pred_region
    _
  $region9: #{neural_net1_forward.1} parent=0 // pred_fallthru
    _
  // Predicated region
  $region10: #{neural_net1_forward.1} parent=0 // pred_check
    _
  $region11: #{neural_net1_forward.1} parent=0 // pred_check_branch
    %16 = sbr.rel (0) target = $region13
  $region12: #{neural_net1_forward.1} parent=0 // pred_region
    _
  $region13: #{neural_net1_forward.1} parent=0 // pred_fallthru
    _
  // Predicated region
  $region14: #{neural_net1_forward.1} parent=0 // pred_check
    _
  $region15: #{neural_net1_forward.1} parent=0 // pred_check_branch
    %18 = sbr.rel (0) target = $region17
  $region16: #{neural_net1_forward.1} parent=0 // pred_region
    _
  $region17: #{neural_net1_forward.1} parent=0 // pred_fallthru
    _
  // Predicated region
  $region18: #{neural_net1_forward.1} parent=0 // pred_check
    _
  $region19: #{neural_net1_forward.1} parent=0 // pred_check_branch
    %20 = sbr.rel (0) target = $region21
  $region20: #{neural_net1_forward.1} parent=0 // pred_region
    _
  $region21: #{neural_net1_forward.1} parent=0 // pred_fallthru
    _
  %v21 = vld [vmem:[%s0] sm:$0xff]
  %v22 = vld [vmem:[%s0 + $0x8] sm:$0xff]
  %v23 = vld [vmem:[%s0 + $0x10] sm:$0xff]
  %v24 = vld [vmem:[%s0 + $0x18] sm:$0xff]
  %v25 = vld [vmem:[%s0 + $0x20] sm:$0xff]
  %v26 = vld [vmem:[%s0 + $0x28] sm:$0xff]
  %v27 = vld [vmem:[%s0 + $0x30] sm:$0xff]
  %v28 = vld [vmem:[%s0 + $0x38] sm:$0xff]
  %v29 = vld [vmem:[%s0 + $0x40] sm:$0xff]
  %v30 = vld [vmem:[%s0 + $0x48] sm:$0xff]
  %v31 = vld [vmem:[%s0 + $0x50] sm:$0xff]
  %v32 = vld [vmem:[%s0 + $0x58] sm:$0xff]
  %v33 = vld [vmem:[%s0 + $0x60] sm:$0xff]
  %v34 = vld [vmem:[%s0 + $0x68] sm:$0xff]
  %v35 = vld [vmem:[%s0 + $0x70] sm:$0xff]
  %v36 = vld [vmem:[%s0 + $0x78] sm:$0xff]
  %v37 = vld [vmem:[%s1] sm:$0xff]
  %v38 = vld [vmem:[%s1 + $0x8] sm:$0xff]
  %v39 = vld [vmem:[%s1 + $0x10] sm:$0xff]
  %v40 = vld [vmem:[%s1 + $0x18] sm:$0xff]
  %v41 = vld [vmem:[%s2] sm:$0x1]
  %v43 = vlaneseq
  %v44 = vshrl.u32 %v43, 7
  %v45 = vsub.s32 0, %v44
  %v46 = vrot.slane %v41, %v45
  %vm48 = vcmask 261120
  %v50 = vsel %vm48, %v21, 0
  %v53 = vsel %vm48, %v22, 0
  %v56 = vsel %vm48, %v23, 0
  %v59 = vsel %vm48, %v24, 0
  %v62 = vsel %vm48, %v25, 0
  %v65 = vsel %vm48, %v26, 0
  %v68 = vsel %vm48, %v27, 0
  %v71 = vsel %vm48, %v28, 0
  %v74 = vsel %vm48, %v29, 0
  %v77 = vsel %vm48, %v30, 0
  %v80 = vsel %vm48, %v31, 0
  %v83 = vsel %vm48, %v32, 0
  %v86 = vsel %vm48, %v33, 0
  %v89 = vsel %vm48, %v34, 0
  %v92 = vsel %vm48, %v35, 0
  %v95 = vsel %vm48, %v36, 0
  %97 = vmatprep.subr.mxu0 0.0
  %98 = vmatpush1.msra.mxu0 %v37
  %99 = vmatprep.subr.mxu0 0.0
  %100 = vmatpush1.msra.mxu0 %v38
  %101 = vmatprep.subr.mxu0 0.0
  %102 = vmatpush1.msra.mxu0 %v39
  %103 = vmatprep.subr.mxu0 0.0
  %104 = vmatpush1.msra.mxu0 %v40
  %105 = vmatprep.subr.mxu0 0.0
  %106 = vmatpush1.msra.mxu0 0.0
  %107 = vmatprep.subr.mxu0 0.0
  %108 = vmatpush1.msra.mxu0 0.0
  %109 = vmatprep.subr.mxu0 0.0
  %110 = vmatpush1.msra.mxu0 0.0
  %111 = vmatprep.subr.mxu0 0.0
  %112 = vmatpush1.msra.mxu0 0.0
  %113 = vmatprep.subr.mxu0 0.0
  %114 = vmatpush1.msra.mxu0 0.0
  %115 = vmatprep.subr.mxu0 0.0
  %116 = vmatpush1.msra.mxu0 0.0
  %117 = vmatprep.subr.mxu0 0.0
  %118 = vmatpush1.msra.mxu0 0.0
  %119 = vmatprep.subr.mxu0 0.0
  %120 = vmatpush1.msra.mxu0 0.0
  %121 = vmatprep.subr.mxu0 0.0
  %122 = vmatpush1.msra.mxu0 0.0
  %123 = vmatprep.subr.mxu0 0.0
  %124 = vmatpush1.msra.mxu0 0.0
  %125 = vmatprep.subr.mxu0 0.0
  %126 = vmatpush1.msra.mxu0 0.0
  %127 = vmatprep.subr.mxu0 0.0
  %128 = vmatpush1.msra.mxu0 0.0
  %129 = vmatprep.subr.mxu0 0.0
  %130 = vmatpush1.msra.mxu0 0.0
  %131 = vmatprep.subr.mxu0 0.0
  %132 = vmatpush1.msra.mxu0 0.0
  %133 = vmatprep.subr.mxu0 0.0
  %134 = vmatpush1.msra.mxu0 0.0
  %135 = vmatprep.subr.mxu0 0.0
  %136 = vmatpush1.msra.mxu0 0.0
  %137 = vmatprep.subr.mxu0 0.0
  %138 = vmatpush1.msra.mxu0 0.0
  %139 = vmatprep.subr.mxu0 0.0
  %140 = vmatpush1.msra.mxu0 0.0
  %141 = vmatprep.subr.mxu0 0.0
  %142 = vmatpush1.msra.mxu0 0.0
  %143 = vmatprep.subr.mxu0 0.0
  %144 = vmatpush1.msra.mxu0 0.0
  %145 = vmatprep.subr.mxu0 0.0
  %146 = vmatpush1.msra.mxu0 0.0
  %147 = vmatprep.subr.mxu0 0.0
  %148 = vmatpush1.msra.mxu0 0.0
  %149 = vmatprep.subr.mxu0 0.0
  %150 = vmatpush1.msra.mxu0 0.0
  %151 = vmatprep.subr.mxu0 0.0
  %152 = vmatpush1.msra.mxu0 0.0
  %153 = vmatprep.subr.mxu0 0.0
  %154 = vmatpush1.msra.mxu0 0.0
  %155 = vmatprep.subr.mxu0 0.0
  %156 = vmatpush1.msra.mxu0 0.0
  %157 = vmatprep.subr.mxu0 0.0
  %158 = vmatpush1.msra.mxu0 0.0
  %159 = vmatprep.subr.mxu0 0.0
  %160 = vmatpush1.msra.mxu0 0.0
  %161 = vmatprep.mubr.f32.mxu0 0.0
  %162 = vmatmul.mubr.f32.gmra.mrb[0].mxu0 %v50
  %v163 = vpop.f32.mrb[0].mxu0
  %v164 = vadd.f32 %v46, %v163
  %v165 = vpop.f32.mrb[0].mxu0
  %166 = vmatprep.mubr.f32.mxu0 0.0
  %167 = vmatmul.mubr.f32.gmra.mrb[0].mxu0 %v53
  %v168 = vpop.f32.mrb[0].mxu0
  %v169 = vadd.f32 %v46, %v168
  %v170 = vpop.f32.mrb[0].mxu0
  %171 = vmatprep.mubr.f32.mxu0 0.0
  %172 = vmatmul.mubr.f32.gmra.mrb[0].mxu0 %v56
  %v173 = vpop.f32.mrb[0].mxu0
  %v174 = vadd.f32 %v46, %v173
  %v175 = vpop.f32.mrb[0].mxu0
  %176 = vmatprep.mubr.f32.mxu0 0.0
  %177 = vmatmul.mubr.f32.gmra.mrb[0].mxu0 %v59
  %v178 = vpop.f32.mrb[0].mxu0
  %v179 = vadd.f32 %v46, %v178
  %v180 = vpop.f32.mrb[0].mxu0
  %181 = vmatprep.mubr.f32.mxu0 0.0
  %182 = vmatmul.mubr.f32.gmra.mrb[0].mxu0 %v62
  %v183 = vpop.f32.mrb[0].mxu0
  %v184 = vadd.f32 %v46, %v183
  %v185 = vpop.f32.mrb[0].mxu0
  %186 = vmatprep.mubr.f32.mxu0 0.0
  %187 = vmatmul.mubr.f32.gmra.mrb[0].mxu0 %v65
  %v188 = vpop.f32.mrb[0].mxu0
  %v189 = vadd.f32 %v46, %v188
  %v190 = vpop.f32.mrb[0].mxu0
  %191 = vmatprep.mubr.f32.mxu0 0.0
  %192 = vmatmul.mubr.f32.gmra.mrb[0].mxu0 %v68
  %v193 = vpop.f32.mrb[0].mxu0
  %v194 = vadd.f32 %v46, %v193
  %v195 = vpop.f32.mrb[0].mxu0
  %196 = vmatprep.mubr.f32.mxu0 0.0
  %197 = vmatmul.mubr.f32.gmra.mrb[0].mxu0 %v71
  %v198 = vpop.f32.mrb[0].mxu0
  %v199 = vadd.f32 %v46, %v198
  %v200 = vpop.f32.mrb[0].mxu0
  %201 = vmatprep.mubr.f32.mxu0 0.0
  %202 = vmatmul.mubr.f32.gmra.mrb[0].mxu0 %v74
  %v203 = vpop.f32.mrb[0].mxu0
  %v204 = vadd.f32 %v46, %v203
  %v205 = vpop.f32.mrb[0].mxu0
  %206 = vmatprep.mubr.f32.mxu0 0.0
  %207 = vmatmul.mubr.f32.gmra.mrb[0].mxu0 %v77
  %v208 = vpop.f32.mrb[0].mxu0
  %v209 = vadd.f32 %v46, %v208
  %v210 = vpop.f32.mrb[0].mxu0
  %211 = vmatprep.mubr.f32.mxu0 0.0
  %212 = vmatmul.mubr.f32.gmra.mrb[0].mxu0 %v80
  %v213 = vpop.f32.mrb[0].mxu0
  %v214 = vadd.f32 %v46, %v213
  %v215 = vpop.f32.mrb[0].mxu0
  %216 = vmatprep.mubr.f32.mxu0 0.0
  %217 = vmatmul.mubr.f32.gmra.mrb[0].mxu0 %v83
  %v218 = vpop.f32.mrb[0].mxu0
  %v219 = vadd.f32 %v46, %v218
  %v220 = vpop.f32.mrb[0].mxu0
  %221 = vmatprep.mubr.f32.mxu0 0.0
  %222 = vmatmul.mubr.f32.gmra.mrb[0].mxu0 %v86
  %v223 = vpop.f32.mrb[0].mxu0
  %v224 = vadd.f32 %v46, %v223
  %v225 = vpop.f32.mrb[0].mxu0
  %226 = vmatprep.mubr.f32.mxu0 0.0
  %227 = vmatmul.mubr.f32.gmra.mrb[0].mxu0 %v89
  %v228 = vpop.f32.mrb[0].mxu0
  %v229 = vadd.f32 %v46, %v228
  %v230 = vpop.f32.mrb[0].mxu0
  %231 = vmatprep.mubr.f32.mxu0 0.0
  %232 = vmatmul.mubr.f32.gmra.mrb[0].mxu0 %v92
  %v233 = vpop.f32.mrb[0].mxu0
  %v234 = vadd.f32 %v46, %v233
  %v235 = vpop.f32.mrb[0].mxu0
  %236 = vmatprep.mubr.f32.mxu0 0.0
  %237 = vmatmul.mubr.f32.gmra.mrb[0].mxu0 %v95
  %v238 = vpop.f32.mrb[0].mxu0
  %v239 = vadd.f32 %v46, %v238
  %v240 = vpop.f32.mrb[0].mxu0
  %241 = vdwg.mxu0
  %v242 = vmax.f32 %v164, 0.0
  %v243 = vmax.f32 %v169, 0.0
  %v244 = vmax.f32 %v174, 0.0
  %v245 = vmax.f32 %v179, 0.0
  %v246 = vmax.f32 %v184, 0.0
  %v247 = vmax.f32 %v189, 0.0
  %v248 = vmax.f32 %v194, 0.0
  %v249 = vmax.f32 %v199, 0.0
  %v250 = vmax.f32 %v204, 0.0
  %v251 = vmax.f32 %v209, 0.0
  %v252 = vmax.f32 %v214, 0.0
  %v253 = vmax.f32 %v219, 0.0
  %v254 = vmax.f32 %v224, 0.0
  %v255 = vmax.f32 %v229, 0.0
  %v256 = vmax.f32 %v234, 0.0
  %v257 = vmax.f32 %v239, 0.0
  %v258 = vld [vmem:[%s3] sm:$0x1]
  %v260 = vlaneseq
  %v261 = vshrl.u32 %v260, 7
  %v262 = vsub.s32 0, %v261
  %v263 = vrot.slane %v258, %v262
  %v265 = vmul.f32 %v242, %v263
  %v266 = vmul.f32 %v243, %v263
  %v267 = vmul.f32 %v244, %v263
  %v268 = vmul.f32 %v245, %v263
  %v269 = vmul.f32 %v246, %v263
  %v270 = vmul.f32 %v247, %v263
  %v271 = vmul.f32 %v248, %v263
  %v272 = vmul.f32 %v249, %v263
  %v273 = vmul.f32 %v250, %v263
  %v274 = vmul.f32 %v251, %v263
  %v275 = vmul.f32 %v252, %v263
  %v276 = vmul.f32 %v253, %v263
  %v277 = vmul.f32 %v254, %v263
  %v278 = vmul.f32 %v255, %v263
  %v279 = vmul.f32 %v256, %v263
  %v280 = vmul.f32 %v257, %v263
  %v281 = vsel %vm48, %v265, 0.0
  %282 = vadd.xlane.f32.xlu0 %v281
  %v283 = vpop.xlane.xlu0 %282
  %v284 = vsel %vm48, %v266, 0.0
  %285 = vadd.xlane.f32.xlu0 %v284
  %v286 = vpop.xlane.xlu0 %285
  %v287 = vsel %vm48, %v267, 0.0
  %288 = vadd.xlane.f32.xlu0 %v287
  %v289 = vpop.xlane.xlu0 %288
  %v290 = vsel %vm48, %v268, 0.0
  %291 = vadd.xlane.f32.xlu0 %v290
  %v292 = vpop.xlane.xlu0 %291
  %v293 = vsel %vm48, %v269, 0.0
  %294 = vadd.xlane.f32.xlu0 %v293
  %v295 = vpop.xlane.xlu0 %294
  %v296 = vsel %vm48, %v270, 0.0
  %297 = vadd.xlane.f32.xlu0 %v296
  %v298 = vpop.xlane.xlu0 %297
  %v299 = vsel %vm48, %v271, 0.0
  %300 = vadd.xlane.f32.xlu0 %v299
  %v301 = vpop.xlane.xlu0 %300
  %v302 = vsel %vm48, %v272, 0.0
  %303 = vadd.xlane.f32.xlu0 %v302
  %v304 = vpop.xlane.xlu0 %303
  %v305 = vsel %vm48, %v273, 0.0
  %306 = vadd.xlane.f32.xlu0 %v305
  %v307 = vpop.xlane.xlu0 %306
  %v308 = vsel %vm48, %v274, 0.0
  %309 = vadd.xlane.f32.xlu0 %v308
  %v310 = vpop.xlane.xlu0 %309
  %v311 = vsel %vm48, %v275, 0.0
  %312 = vadd.xlane.f32.xlu0 %v311
  %v313 = vpop.xlane.xlu0 %312
  %v314 = vsel %vm48, %v276, 0.0
  %315 = vadd.xlane.f32.xlu0 %v314
  %v316 = vpop.xlane.xlu0 %315
  %v317 = vsel %vm48, %v277, 0.0
  %318 = vadd.xlane.f32.xlu0 %v317
  %v319 = vpop.xlane.xlu0 %318
  %v320 = vsel %vm48, %v278, 0.0
  %321 = vadd.xlane.f32.xlu0 %v320
  %v322 = vpop.xlane.xlu0 %321
  %v323 = vsel %vm48, %v279, 0.0
  %324 = vadd.xlane.f32.xlu0 %v323
  %v325 = vpop.xlane.xlu0 %324
  %v326 = vsel %vm48, %v280, 0.0
  %327 = vadd.xlane.f32.xlu0 %v326
  %v328 = vpop.xlane.xlu0 %327
  %s329 = sld [smem:[#allocation2]]
  %v330 = vstv %s329
  %v331 = vadd.f32 %v283, %v330
  %v332 = vadd.f32 %v286, %v330
  %v333 = vadd.f32 %v289, %v330
  %v334 = vadd.f32 %v292, %v330
  %v335 = vadd.f32 %v295, %v330
  %v336 = vadd.f32 %v298, %v330
  %v337 = vadd.f32 %v301, %v330
  %v338 = vadd.f32 %v304, %v330
  %v339 = vadd.f32 %v307, %v330
  %v340 = vadd.f32 %v310, %v330
  %v341 = vadd.f32 %v313, %v330
  %v342 = vadd.f32 %v316, %v330
  %v343 = vadd.f32 %v319, %v330
  %v344 = vadd.f32 %v322, %v330
  %v345 = vadd.f32 %v325, %v330
  %v346 = vadd.f32 %v328, %v330
  %v347 = vsub.f32 0.0, %v331
  %v348 = vsub.f32 0.0, %v332
  %v349 = vsub.f32 0.0, %v333
  %v350 = vsub.f32 0.0, %v334
  %v351 = vsub.f32 0.0, %v335
  %v352 = vsub.f32 0.0, %v336
  %v353 = vsub.f32 0.0, %v337
  %v354 = vsub.f32 0.0, %v338
  %v355 = vsub.f32 0.0, %v339
  %v356 = vsub.f32 0.0, %v340
  %v357 = vsub.f32 0.0, %v341
  %v358 = vsub.f32 0.0, %v342
  %v359 = vsub.f32 0.0, %v343
  %v360 = vsub.f32 0.0, %v344
  %v361 = vsub.f32 0.0, %v345
  %v362 = vsub.f32 0.0, %v346
  %v363 = vmul.f32 %v347, 1.442695
  %v364 = vpow.pop %v363
  %v365 = vmul.f32 %v348, 1.442695
  %v366 = vpow.pop %v365
  %v367 = vmul.f32 %v349, 1.442695
  %v368 = vpow.pop %v367
  %v369 = vmul.f32 %v350, 1.442695
  %v370 = vpow.pop %v369
  %v371 = vmul.f32 %v351, 1.442695
  %v372 = vpow.pop %v371
  %v373 = vmul.f32 %v352, 1.442695
  %v374 = vpow.pop %v373
  %v375 = vmul.f32 %v353, 1.442695
  %v376 = vpow.pop %v375
  %v377 = vmul.f32 %v354, 1.442695
  %v378 = vpow.pop %v377
  %v379 = vmul.f32 %v355, 1.442695
  %v380 = vpow.pop %v379
  %v381 = vmul.f32 %v356, 1.442695
  %v382 = vpow.pop %v381
  %v383 = vmul.f32 %v357, 1.442695
  %v384 = vpow.pop %v383
  %v385 = vmul.f32 %v358, 1.442695
  %v386 = vpow.pop %v385
  %v387 = vmul.f32 %v359, 1.442695
  %v388 = vpow.pop %v387
  %v389 = vmul.f32 %v360, 1.442695
  %v390 = vpow.pop %v389
  %v391 = vmul.f32 %v361, 1.442695
  %v392 = vpow.pop %v391
  %v393 = vmul.f32 %v362, 1.442695
  %v394 = vpow.pop %v393
  %v395 = vadd.f32 %v364, 1.0
  %v396 = vadd.f32 %v366, 1.0
  %v397 = vadd.f32 %v368, 1.0
  %v398 = vadd.f32 %v370, 1.0
  %v399 = vadd.f32 %v372, 1.0
  %v400 = vadd.f32 %v374, 1.0
  %v401 = vadd.f32 %v376, 1.0
  %v402 = vadd.f32 %v378, 1.0
  %v403 = vadd.f32 %v380, 1.0
  %v404 = vadd.f32 %v382, 1.0
  %v405 = vadd.f32 %v384, 1.0
  %v406 = vadd.f32 %v386, 1.0
  %v407 = vadd.f32 %v388, 1.0
  %v408 = vadd.f32 %v390, 1.0
  %v409 = vadd.f32 %v392, 1.0
  %v410 = vadd.f32 %v394, 1.0
  %v411 = vrcp.pop %v395
  %v412 = vrcp.pop %v396
  %v413 = vrcp.pop %v397
  %v414 = vrcp.pop %v398
  %v415 = vrcp.pop %v399
  %v416 = vrcp.pop %v400
  %v417 = vrcp.pop %v401
  %v418 = vrcp.pop %v402
  %v419 = vrcp.pop %v403
  %v420 = vrcp.pop %v404
  %v421 = vrcp.pop %v405
  %v422 = vrcp.pop %v406
  %v423 = vrcp.pop %v407
  %v424 = vrcp.pop %v408
  %v425 = vrcp.pop %v409
  %v426 = vrcp.pop %v410
  %v443 = vlaneseq
  %v444 = vand.u32 %v443, 127
  %v445 = vlaneseq
  %v446 = vshrl.u32 %v445, 7
  %v447 = vsub.s32 %v444, %v446
  %v448 = vrot.slane %v411, %v447
  %v449 = vadd.s32 %v444, 4294967288
  %v450 = vlaneseq
  %v451 = vshrl.u32 %v450, 7
  %v452 = vsub.s32 %v449, %v451
  %v453 = vrot.slane %v412, %v452
  %vm454 = vcmask 130112
  %v455 = vsel %vm454, %v453, %v448
  %v456 = vadd.s32 %v444, 4294967280
  %v457 = vlaneseq
  %v458 = vshrl.u32 %v457, 7
  %v459 = vsub.s32 %v456, %v458
  %v460 = vrot.slane %v413, %v459
  %vm461 = vcmask 195712
  %v462 = vsel %vm461, %v460, %v455
  %v463 = vadd.s32 %v444, 4294967272
  %v464 = vlaneseq
  %v465 = vshrl.u32 %v464, 7
  %v466 = vsub.s32 %v463, %v465
  %v467 = vrot.slane %v414, %v466
  %vm468 = vcmask 261312
  %v469 = vsel %vm468, %v467, %v462
  %v470 = vadd.s32 %v444, 4294967264
  %v471 = vlaneseq
  %v472 = vshrl.u32 %v471, 7
  %v473 = vsub.s32 %v470, %v472
  %v474 = vrot.slane %v415, %v473
  %vm475 = vcmask 326912
  %v476 = vsel %vm475, %v474, %v469
  %v477 = vadd.s32 %v444, 4294967256
  %v478 = vlaneseq
  %v479 = vshrl.u32 %v478, 7
  %v480 = vsub.s32 %v477, %v479
  %v481 = vrot.slane %v416, %v480
  %vm482 = vcmask 392512
  %v483 = vsel %vm482, %v481, %v476
  %v484 = vadd.s32 %v444, 4294967248
  %v485 = vlaneseq
  %v486 = vshrl.u32 %v485, 7
  %v487 = vsub.s32 %v484, %v486
  %v488 = vrot.slane %v417, %v487
  %vm489 = vcmask 458112
  %v490 = vsel %vm489, %v488, %v483
  %v491 = vadd.s32 %v444, 4294967240
  %v492 = vlaneseq
  %v493 = vshrl.u32 %v492, 7
  %v494 = vsub.s32 %v491, %v493
  %v495 = vrot.slane %v418, %v494
  %vm496 = vcmask 523712
  %v497 = vsel %vm496, %v495, %v490
  %v498 = vadd.s32 %v444, 4294967232
  %v499 = vlaneseq
  %v500 = vshrl.u32 %v499, 7
  %v501 = vsub.s32 %v498, %v500
  %v502 = vrot.slane %v419, %v501
  %vm503 = vcmask 589312
  %v504 = vsel %vm503, %v502, %v497
  %v505 = vadd.s32 %v444, 4294967224
  %v506 = vlaneseq
  %v507 = vshrl.u32 %v506, 7
  %v508 = vsub.s32 %v505, %v507
  %v509 = vrot.slane %v420, %v508
  %vm510 = vcmask 654912
  %v511 = vsel %vm510, %v509, %v504
  %v512 = vadd.s32 %v444, 4294967216
  %v513 = vlaneseq
  %v514 = vshrl.u32 %v513, 7
  %v515 = vsub.s32 %v512, %v514
  %v516 = vrot.slane %v421, %v515
  %vm517 = vcmask 720512
  %v518 = vsel %vm517, %v516, %v511
  %v519 = vadd.s32 %v444, 4294967208
  %v520 = vlaneseq
  %v521 = vshrl.u32 %v520, 7
  %v522 = vsub.s32 %v519, %v521
  %v523 = vrot.slane %v422, %v522
  %vm524 = vcmask 786112
  %v525 = vsel %vm524, %v523, %v518
  %v526 = vadd.s32 %v444, 4294967200
  %v527 = vlaneseq
  %v528 = vshrl.u32 %v527, 7
  %v529 = vsub.s32 %v526, %v528
  %v530 = vrot.slane %v423, %v529
  %vm531 = vcmask 851712
  %v532 = vsel %vm531, %v530, %v525
  %v533 = vadd.s32 %v444, 4294967192
  %v534 = vlaneseq
  %v535 = vshrl.u32 %v534, 7
  %v536 = vsub.s32 %v533, %v535
  %v537 = vrot.slane %v424, %v536
  %vm538 = vcmask 917312
  %v539 = vsel %vm538, %v537, %v532
  %v540 = vadd.s32 %v444, 4294967184
  %v541 = vlaneseq
  %v542 = vshrl.u32 %v541, 7
  %v543 = vsub.s32 %v540, %v542
  %v544 = vrot.slane %v425, %v543
  %vm545 = vcmask 982912
  %v546 = vsel %vm545, %v544, %v539
  %v547 = vadd.s32 %v444, 4294967176
  %v548 = vlaneseq
  %v549 = vshrl.u32 %v548, 7
  %v550 = vsub.s32 %v547, %v549
  %v551 = vrot.slane %v426, %v550
  %vm552 = vcmask 1048512
  %v553 = vsel %vm552, %v551, %v546
  %555 = vst [vmem:[%s5] sm:$0x1] %v553
  // Predicated region
  $region22: #{neural_net1_forward.1} parent=0 // pred_check
    _
  $region23: #{neural_net1_forward.1} parent=0 // pred_check_branch
    %557 = sbr.rel (0) target = $region25
  $region24: #{neural_net1_forward.1} parent=0 // pred_region
    _
  $region25: #{neural_net1_forward.1} parent=0 // pred_fallthru
    _
  // Predicated region
  $region26: #{neural_net1_forward.1} parent=0 // pred_check
    _
  $region27: #{neural_net1_forward.1} parent=0 // pred_check_branch
    %559 = sbr.rel (0) target = $region29
  $region28: #{neural_net1_forward.1} parent=0 // pred_region
    _
  $region29: #{neural_net1_forward.1} parent=0 // pred_fallthru
    _

</llo_original>
